<compile_context>
chip_gen: v7x
topology: tpu7x:2x2x1
jax: 0.10.0
libtpu: 0.0.40
codegen_flags: <defaults>
</compile_context>

<pallas_src>
import functools
from types import SimpleNamespace

import jax
import jax.numpy as jnp
from jax.experimental import pallas as pl
from jax.experimental.pallas import tpu as pltpu

LEAKY_SLOPE = 0.01          # torch nn.LeakyReLU default negative_slope
_COMPUTE_DTYPE = jnp.bfloat16


def _leaky_relu(x):
    return jnp.where(x > 0, x, LEAKY_SLOPE * x)


def _tpu_vmem_bytes():
    try:
        return int(pltpu.get_tpu_info().vmem_capacity_bytes)
    except Exception:
        return 64 * 1024 * 1024   # conservative (v7x per-core VMEM)


def _row_tile(n, cap):
    """Largest row tile that divides n, is a multiple of 8, and is <= cap."""
    if n <= cap or n % 8 != 0:
        return n
    t = min(cap, n)
    t -= t % 8
    while t >= 8:
        if n % t == 0:
            return t
        t -= 8
    return n


def _mosaic_params(dimension_semantics, needed_bytes):
    vmem = _tpu_vmem_bytes()
    limit = min(max(2 * int(needed_bytes) + (8 << 20), 32 << 20), (vmem * 3) // 4)
    return pltpu.CompilerParams(dimension_semantics=dimension_semantics,
                                vmem_limit_bytes=limit)


# ----------------------------------------------------------------------------
# Kernel 1: fused video-aware publisher attention over all tag levels.
# grid = (batch_tiles [parallel], levels [arbitrary]); the output block is
# resident across the level axis and accumulates the mean over levels.
# TODO(synk): the reference `Attn` class is not provided; implemented as masked
#             dot-product attention (the standard interpretation of its call).
# ----------------------------------------------------------------------------
def _fused_pub_attn_kernel(video_ref, tag_ref, pub_ref, mask_ref, wk_ref, bk_ref,
                           out_ref, *, num_levels):
    lvl = pl.program_id(1)
    E = video_ref.shape[1]

    # key = Linear(concat([video, tag])) -- concat folded into split matmuls (MXU, bf16 in / f32 out)
    key = (jnp.dot(video_ref[...], wk_ref[:E, :], preferred_element_type=jnp.float32)
           + jnp.dot(tag_ref[...], wk_ref[E:, :], preferred_element_type=jnp.float32)
           + bk_ref[...])                                            # (Bt, E) f32

    pub = pub_ref[...].astype(jnp.float32)                           # (Bt, P, E)

    # scores over publishers: VPU multiply + lane (E) reduce -> (Bt, P)
    scores = jnp.sum(key[:, None, :] * pub, axis=-1)
    valid = mask_ref[...] > 0.0                                      # (Bt, P)
    masked = jnp.where(valid, scores, jnp.float32(-1e30))
    m = jnp.max(masked, axis=-1, keepdims=True)
    e = jnp.where(valid, jnp.exp(masked - m), 0.0)
    denom = jnp.maximum(jnp.sum(e, axis=-1, keepdims=True), jnp.float32(1e-20))
    attn = e * pl.reciprocal(denom, approx=True)                     # (Bt, P)

    # context: VPU multiply + sublane (P) reduce -> (Bt, E)
    ctx = jnp.sum(attn[:, :, None] * pub, axis=1)

    @pl.when(lvl == 0)
    def _():
        out_ref[...] = jnp.zeros_like(out_ref)

    out_ref[...] += ctx

    @pl.when(lvl == num_levels - 1)
    def _():
        out_ref[...] = out_ref[...] * jnp.float32(1.0 / num_levels)


def fused_pub_attn(video_lvls, tag_lvls, pub_lvls, mask, wk, bk):
    T, B, E = video_lvls.shape
    P = pub_lvls.shape[2]
    itemsize = jnp.dtype(video_lvls.dtype).itemsize

    # VMEM-budgeted batch tile (double-buffered input blocks + output block).
    vmem = _tpu_vmem_bytes()
    per_row = 2 * (P * E * itemsize + 2 * E * itemsize + P * 4) + 2 * E * 4
    cap = min(max(8, (vmem // 2) // max(per_row, 1)), 1024)
    tile_b = _row_tile(B, cap)
    # v7x has two TensorCores: prefer >=2 batch tiles so the "parallel" axis
    # actually shards across them.
    if tile_b == B and B >= 16 and (B // 2) % 8 == 0:
        tile_b = B // 2
    nb = pl.cdiv(B, tile_b)      # tile_b divides B by construction

    block_bytes = tile_b * per_row + 2 * E * E * itemsize + E * 4
    flops = T * B * (4 * E * E + 4 * P * E + 8 * P)
    bytes_accessed = (2 * T * B * E * itemsize + T * B * P * E * itemsize
                      + B * P * 4 + 2 * E * E * itemsize + E * 4 + B * E * 4)

    kernel = functools.partial(_fused_pub_attn_kernel, num_levels=T)
    return pl.pallas_call(
        kernel,
        out_shape=jax.ShapeDtypeStruct((B, E), jnp.float32),
        grid_spec=pltpu.PrefetchScalarGridSpec(
            num_scalar_prefetch=0,
            grid=(nb, T),
            in_specs=[
                pl.BlockSpec((None, tile_b, E), lambda b, l: (l, b, 0)),        # video
                pl.BlockSpec((None, tile_b, E), lambda b, l: (l, b, 0)),        # tag
                pl.BlockSpec((None, tile_b, P, E), lambda b, l: (l, b, 0, 0)),  # publishers
                pl.BlockSpec((tile_b, P), lambda b, l: (b, 0)),                 # mask
                pl.BlockSpec((2 * E, E), lambda b, l: (0, 0)),                  # wk (resident)
                pl.BlockSpec((1, E), lambda b, l: (0, 0)),                      # bk (resident)
            ],
            out_specs=pl.BlockSpec((tile_b, E), lambda b, l: (b, 0)),
        ),
        compiler_params=_mosaic_params(("parallel", "arbitrary"), block_bytes),
        cost_estimate=pl.CostEstimate(flops=int(flops),
                                      transcendentals=int(T * B * (P + 1)),
                                      bytes_accessed=int(bytes_accessed)),
    )(video_lvls, tag_lvls, pub_lvls, mask, wk, bk)


# ----------------------------------------------------------------------------
# Kernel 2: pair MLP (Linear(2E->E) -> LeakyReLU -> Linear(E->1)) for all
# pos/neg pairs of one contrastive loss.  The shared operand's w1 projection is
# computed once and reused; the row axis is gridded and the mean(logsigmoid(
# pos - neg)) is accumulated into a resident (1,1) output.
# ----------------------------------------------------------------------------
def _pair_loss_kernel(shared_ref, pos_ref, neg_ref, w1_ref, b1_ref, w2_ref,
                      out_ref, *, shared_first, inv_count):
    i = pl.program_id(0)
    E = shared_ref.shape[1]
    if shared_first:
        w_shared, w_other = w1_ref[:E, :], w1_ref[E:, :]
    else:
        w_other, w_shared = w1_ref[:E, :], w1_ref[E:, :]

    b1 = b1_ref[...]
    shared_proj = jnp.dot(shared_ref[...], w_shared, preferred_element_type=jnp.float32)
    pos_proj = jnp.dot(pos_ref[...], w_other, preferred_element_type=jnp.float32)
    neg_proj = jnp.dot(neg_ref[...], w_other, preferred_element_type=jnp.float32)
    # TODO(synk): nn.Dropout between Linear and LeakyReLU skipped (eval mode).
    h_pos = _leaky_relu(shared_proj + pos_proj + b1)
    h_neg = _leaky_relu(shared_proj + neg_proj + b1)

    # E -> 1 head as VPU multiply + lane reduce (w2 stored as a (1, E) row);
    # the output bias cancels in the pos-neg gap.
    w2 = w2_ref[...]
    gap = (jnp.sum(h_pos * w2, axis=1, keepdims=True)
           - jnp.sum(h_neg * w2, axis=1, keepdims=True))             # (Mt, 1)
    # stable logsigmoid(x) = min(x, 0) - log(1 + exp(-|x|))
    logsig = jnp.minimum(gap, 0.0) - jnp.log(1.0 + jnp.exp(-jnp.abs(gap)))

    @pl.when(i == 0)
    def _():
        out_ref[...] = jnp.zeros_like(out_ref)

    out_ref[...] += jnp.sum(logsig, keepdims=True)

    @pl.when(i == pl.num_programs(0) - 1)
    def _():
        out_ref[...] = out_ref[...] * jnp.float32(inv_count)


def pair_logsig_mean(shared, pos_other, neg_other, w1, b1, w2_row, *, shared_first):
    M, E = shared.shape
    itemsize = jnp.dtype(shared.dtype).itemsize
    tile_m = _row_tile(M, 256)
    nt = pl.cdiv(M, tile_m)

    kernel = functools.partial(_pair_loss_kernel, shared_first=shared_first,
                               inv_count=1.0 / M)
    flops = 6 * M * E * E + 10 * M * E
    bytes_accessed = 3 * M * E * itemsize + 2 * E * E * itemsize + 2 * E * 4 + 4
    needed = 2 * (3 * tile_m * E * itemsize) + 2 * E * E * itemsize

    out = pl.pallas_call(
        kernel,
        out_shape=jax.ShapeDtypeStruct((1, 1), jnp.float32),
        grid_spec=pltpu.PrefetchScalarGridSpec(
            num_scalar_prefetch=0,
            grid=(nt,),
            in_specs=[
                pl.BlockSpec((tile_m, E), lambda i: (i, 0)),       # shared operand
                pl.BlockSpec((tile_m, E), lambda i: (i, 0)),       # pos "other"
                pl.BlockSpec((tile_m, E), lambda i: (i, 0)),       # neg "other"
                pl.BlockSpec((2 * E, E), lambda i: (0, 0)),        # w1 (resident)
                pl.BlockSpec((1, E), lambda i: (0, 0)),            # b1
                pl.BlockSpec((1, E), lambda i: (0, 0)),            # w2 row
            ],
            out_specs=pl.BlockSpec((1, 1), lambda i: (0, 0)),
        ),
        compiler_params=_mosaic_params(("arbitrary",), needed),
        cost_estimate=pl.CostEstimate(flops=int(flops),
                                      transcendentals=int(2 * M),
                                      bytes_accessed=int(bytes_accessed)),
    )(shared, pos_other, neg_other, w1, b1, w2_row)
    return out[0, 0]


# ----------------------------------------------------------------------------
# Kernel 3: task DNN (4E -> 2E -> E -> 1) + sigmoid probs + fused BCE-with-
# logits.  Gridded over batch tiles; BCE sum accumulated into a resident (1,1)
# output and normalized at the last step.
# ----------------------------------------------------------------------------
def _task_dnn_kernel(x_ref, lbl_ref, w1_ref, b1_ref, w2_ref, b2_ref, w3_ref, b3_ref,
                     probs_ref, bce_ref, *, inv_b):
    i = pl.program_id(0)
    h = jnp.dot(x_ref[...], w1_ref[...], preferred_element_type=jnp.float32) + b1_ref[...]
    h = _leaky_relu(h)
    h = jnp.dot(h.astype(w2_ref.dtype), w2_ref[...],
                preferred_element_type=jnp.float32) + b2_ref[...]
    h = _leaky_relu(h)
    # final E -> 1 layer as VPU multiply + lane reduce (frees the MXU)
    logits = jnp.sum(h * w3_ref[...], axis=1, keepdims=True) + b3_ref[...]   # (Bt, 1)

    probs_ref[...] = 0.5 * (jnp.tanh(0.5 * logits) + 1.0)    # stable sigmoid (EUP tanh)

    # BCE with logits: max(z,0) - z*y + log(1 + exp(-|z|))  (== BCE(sigmoid(z), y))
    y = lbl_ref[...]
    per_row = (jnp.maximum(logits, 0.0) - logits * y
               + jnp.log(1.0 + jnp.exp(-jnp.abs(logits))))

    @pl.when(i == 0)
    def _():
        bce_ref[...] = jnp.zeros_like(bce_ref)

    bce_ref[...] += jnp.sum(per_row, keepdims=True)

    @pl.when(i == pl.num_programs(0) - 1)
    def _():
        bce_ref[...] = bce_ref[...] * jnp.float32(inv_b)


def task_dnn_bce(x, labels_col, w1, b1, w2, b2, w3_row, b3):
    B, F = x.shape             # F = 4E
    E2 = w1.shape[1]           # 2E
    E = w2.shape[1]            # E
    itemsize = jnp.dtype(x.dtype).itemsize
    tile_b = _row_tile(B, 256)
    nt = pl.cdiv(B, tile_b)

    kernel = functools.partial(_task_dnn_kernel, inv_b=1.0 / B)
    flops = 2 * B * F * E2 + 2 * B * E2 * E + 6 * B * E
    bytes_accessed = (B * F * itemsize + B * 4 + F * E2 * itemsize + E2 * 4
                      + E2 * E * itemsize + 2 * E * 4 + 4 + B * 4 + 4)
    needed = 2 * tile_b * F * itemsize + F * E2 * itemsize + E2 * E * itemsize

    probs, bce = pl.pallas_call(
        kernel,
        out_shape=(jax.ShapeDtypeStruct((B, 1), jnp.float32),
                   jax.ShapeDtypeStruct((1, 1), jnp.float32)),
        grid_spec=pltpu.PrefetchScalarGridSpec(
            num_scalar_prefetch=0,
            grid=(nt,),
            in_specs=[
                pl.BlockSpec((tile_b, F), lambda i: (i, 0)),       # x
                pl.BlockSpec((tile_b, 1), lambda i: (i, 0)),       # labels
                pl.BlockSpec((F, E2), lambda i: (0, 0)),           # w1 (resident)
                pl.BlockSpec((1, E2), lambda i: (0, 0)),
                pl.BlockSpec((E2, E), lambda i: (0, 0)),           # w2 (resident)
                pl.BlockSpec((1, E), lambda i: (0, 0)),
                pl.BlockSpec((1, E), lambda i: (0, 0)),            # w3 row
                pl.BlockSpec((1, 1), lambda i: (0, 0)),            # b3
            ],
            out_specs=(pl.BlockSpec((tile_b, 1), lambda i: (i, 0)),
                       pl.BlockSpec((1, 1), lambda i: (0, 0))),
        ),
        compiler_params=_mosaic_params(("arbitrary",), needed),
        cost_estimate=pl.CostEstimate(flops=int(flops),
                                      transcendentals=int(3 * B),
                                      bytes_accessed=int(bytes_accessed)),
    )(x, labels_col, w1, b1, w2, b2, w3_row, b3)
    return probs[:, 0], bce[0, 0]


# ----------------------------------------------------------------------------
# Parameter construction (deterministic, xavier-uniform style)
# ----------------------------------------------------------------------------
def xavier_uniform(key, shape):
    fan_in, fan_out = shape[0], shape[1]
    bound = (6.0 / (fan_in + fan_out)) ** 0.5
    return jax.random.uniform(key, shape, jnp.float32, -bound, bound)


def init_params(key, config):
    E = config.emb_dim
    T = config.tag_level_num
    cd = config.count_dict
    keys = iter(jax.random.split(key, 64))
    params = {
        'user_emb':  [xavier_uniform(next(keys), (cd['user_id'], E)) for _ in range(T)],
        'video_emb': [xavier_uniform(next(keys), (cd['photo_id'], E)) for _ in range(T)],
        'pub_emb':   [xavier_uniform(next(keys), (cd['publishers'], E)) for _ in range(T)],
        'tag_emb':   [xavier_uniform(next(keys), (cd[f'tag{i}'], E)) for i in range(T)],
        'domain_emb': xavier_uniform(next(keys), (cd['domain_id'], E)),
        'key_attn_w': xavier_uniform(next(keys), (2 * E, E)),
        'key_attn_b': jnp.zeros((1, E), jnp.float32),
        'inter_w1': xavier_uniform(next(keys), (2 * E, E)),
        'inter_b1': jnp.zeros((1, E), jnp.float32),
        'inter_w2': xavier_uniform(next(keys), (1, E)),      # stored as row (wT)
        'intra_w1': xavier_uniform(next(keys), (2 * E, E)),
        'intra_b1': jnp.zeros((1, E), jnp.float32),
        'intra_w2': xavier_uniform(next(keys), (1, E)),      # stored as row (wT)
        'task_w1': xavier_uniform(next(keys), (4 * E, 2 * E)),
        'task_b1': jnp.zeros((1, 2 * E), jnp.float32),
        'task_w2': xavier_uniform(next(keys), (2 * E, E)),
        'task_b2': jnp.zeros((1, E), jnp.float32),
        'task_w3': xavier_uniform(next(keys), (1, E)),       # stored as row (wT)
        'task_b3': jnp.zeros((1, 1), jnp.float32),
    }
    return params


# ----------------------------------------------------------------------------
# Forward pass (mirrors TGMAPE.forward)
# ----------------------------------------------------------------------------
def tgmape_forward(params, data_dict, config):
    T = config.tag_level_num
    E = config.emb_dim
    cdt = _COMPUTE_DTYPE

    # TODO(synk): IntraAggr graph aggregation module is not defined in the
    #             reference source; the raw per-level embedding tables are used
    #             as the aggregated graph embeddings.
    graph_list = {
        'user': params['user_emb'],
        'video': params['video_emb'],
        'publishers': params['pub_emb'],
        'tags': params['tag_emb'],
    }

    vi = data_dict['video']
    B = vi.shape[0]
    domain_emb = params['domain_emb'][data_dict['domain_id']]          # (B, E)

    # per-level video embeddings of the batch (reused everywhere)
    video_lvls = jnp.stack([graph_list['video'][i][vi] for i in range(T)], axis=0)  # (T,B,E) f32
    video_lvls_c = video_lvls.astype(cdt)

    # ---- get_hiretical_emb -------------------------------------------------
    user_lvls = jnp.stack([graph_list['user'][i][data_dict['user']] for i in range(T)], axis=0)
    user_feat = user_lvls.mean(axis=0)                                 # (B, E)
    video_feat = video_lvls.mean(axis=0)                               # (B, E)

    mask = (data_dict['publishers'] > 0).astype(jnp.float32)           # (B, P)
    pub_lvls = jnp.stack([graph_list['publishers'][i][data_dict['publishers']]
                          for i in range(T)], axis=0).astype(cdt)      # (T, B, P, E) bf16
    tag_lvls = jnp.stack([graph_list['tags'][i][data_dict['tags'][:, i]]
                          for i in range(T)], axis=0).astype(cdt)      # (T, B, E) bf16
    pub_feat = fused_pub_attn(video_lvls_c, tag_lvls, pub_lvls, mask,
                              params['key_attn_w'].astype(cdt),
                              params['key_attn_b'])                    # (B, E) f32

    # ---- get_inter_cst_loss (single gridded kernel, shared operand de-duped) --
    if T > 1:
        M = (T - 1) * B
        shared = video_lvls_c[1:].reshape(M, E)                        # V_i[vi] (2nd slot)
        pos_left = video_lvls_c[:-1].reshape(M, E)                     # V_{i-1}[vi]
        neg_left = jnp.stack([graph_list['video'][i][data_dict['neg_par_video'][:, i]]
                              for i in range(T - 1)], axis=0).astype(cdt).reshape(M, E)
        inter_mean = pair_logsig_mean(shared, pos_left, neg_left,
                                      params['inter_w1'].astype(cdt), params['inter_b1'],
                                      params['inter_w2'], shared_first=False)
        # sum_i(-lambda * mean_B) / (T-1)  ==  -lambda * mean over all pairs
        inter_cst_loss = -config.inter_cst_lambda * inter_mean
    else:
        inter_cst_loss = jnp.float32(0.0)

    # ---- get_intra_cst_loss (single gridded kernel, shared operand de-duped) --
    if T > 1:
        M = (T - 1) * B
        neg_vi = data_dict['pos_bro_video']   # name swap mirrors the reference code
        pos_vi = data_dict['neg_bro_video']
        shared = video_lvls_c[1:].reshape(M, E)                        # V_i[vi] (1st slot)
        pos_right = jnp.stack([graph_list['video'][i][pos_vi[:, i]]
                               for i in range(1, T)], axis=0).astype(cdt).reshape(M, E)
        neg_right = jnp.stack([graph_list['video'][i][neg_vi[:, i]]
                               for i in range(1, T)], axis=0).astype(cdt).reshape(M, E)
        intra_mean = pair_logsig_mean(shared, pos_right, neg_right,
                                      params['intra_w1'].astype(cdt), params['intra_b1'],
                                      params['intra_w2'], shared_first=True)
        intra_cst_loss = -config.intra_cst_lambda * intra_mean
    else:
        intra_cst_loss = jnp.float32(0.0)

    # ---- task DNN + sigmoid + BCE (single fused, gridded kernel) -------------
    x = jnp.concatenate([user_feat, video_feat, pub_feat, domain_emb], axis=1).astype(cdt)
    labels = data_dict['long_view'].astype(jnp.float32)
    task_outputs, bce = task_dnn_bce(x, labels[:, None],
                                     params['task_w1'].astype(cdt), params['task_b1'],
                                     params['task_w2'].astype(cdt), params['task_b2'],
                                     params['task_w3'], params['task_b3'])

    return ({'bpr_loss': bce,
             'inter_cst_loss': inter_cst_loss,
             'intra_cst_loss': intra_cst_loss},
            task_outputs)


# ----------------------------------------------------------------------------
if __name__ == "__main__":
    B, E, T, P = 8, 32, 3, 8
    config = SimpleNamespace(
        device=None,
        emb_dim=E,
        tag_level_num=T,
        count_dict={'user_id': 16, 'photo_id': 16, 'publishers': 16,
                    'tag0': 8, 'tag1': 8, 'tag2': 8, 'domain_id': 4},
        publisher_attn_method='dot',
        intra_cst_lambda=0.1,
        inter_cst_lambda=0.1,
    )

    root = jax.random.PRNGKey(0)
    k_param, k_data = jax.random.split(root)
    params = init_params(k_param, config)

    dks = jax.random.split(k_data, 10)
    data_dict = {
        'user': jax.random.randint(dks[0], (B,), 0, config.count_dict['user_id']),
        'video': jax.random.randint(dks[1], (B,), 0, config.count_dict['photo_id']),
        # publishers: id 0 is padding (masked); guarantee at least one valid per row
        'publishers': jax.random.randint(dks[2], (B, P), 0, config.count_dict['publishers'])
                      .at[:, 0].set(1 + jax.random.randint(dks[3], (B,), 0,
                                                           config.count_dict['publishers'] - 1)),
        'tags': jax.random.randint(dks[4], (B, T), 0, 8),
        'domain_id': jax.random.randint(dks[5], (B,), 0, config.count_dict['domain_id']),
        'neg_par_video': jax.random.randint(dks[6], (B, T), 0, config.count_dict['photo_id']),
        'pos_bro_video': jax.random.randint(dks[7], (B, T), 0, config.count_dict['photo_id']),
        'neg_bro_video': jax.random.randint(dks[8], (B, T), 0, config.count_dict['photo_id']),
        'long_view': jax.random.bernoulli(dks[9], 0.5, (B,)).astype(jnp.float32),
    }

    losses, task_outputs = tgmape_forward(params, data_dict, config)
    jax.block_until_ready((losses, task_outputs))
    assert task_outputs.shape == (B,)
    assert all(jnp.isfinite(v) for v in losses.values())
    print("KERNEL_OK")
</pallas_src>

<mosaic_0001>
module attributes {stable_mosaic.version = 11 : i64} {
  func.func @_fused_pub_attn_kernel(%arg0: i32, %arg1: i32, %arg2: memref<1x8x32xbf16, #tpu.memory_space<vmem>>, %arg3: memref<1x8x32xbf16, #tpu.memory_space<vmem>>, %arg4: memref<1x8x8x32xbf16, #tpu.memory_space<vmem>>, %arg5: memref<8x8xf32, #tpu.memory_space<vmem>>, %arg6: memref<64x32xbf16, #tpu.memory_space<vmem>>, %arg7: memref<1x32xf32, #tpu.memory_space<vmem>>, %arg8: memref<8x32xf32, #tpu.memory_space<vmem>>) attributes {dimension_semantics = [#tpu.dimension_semantics<parallel>, #tpu.dimension_semantics<arbitrary>], iteration_bounds = array<i64: 1, 3>, scalar_prefetch = 0 : i64, scratch_operands = 0 : i64, tpu.core_type = #tpu.core_type<tc>, window_params = [{transform_indices = @transform_0, window_bounds = array<i64: 1, 8, 32>}, {transform_indices = @transform_1, window_bounds = array<i64: 1, 8, 32>}, {transform_indices = @transform_2, window_bounds = array<i64: 1, 8, 8, 32>}, {transform_indices = @transform_3, window_bounds = array<i64: 8, 8>}, {pipeline_mode = #tpu.pipeline_mode<synchronous>, transform_indices = @transform_4, window_bounds = array<i64: 64, 32>}, {pipeline_mode = #tpu.pipeline_mode<synchronous>, transform_indices = @transform_5, window_bounds = array<i64: 1, 32>}, {transform_indices = @transform_6, window_bounds = array<i64: 8, 32>}]} {
    %c0 = arith.constant 0 : index
    %c0_0 = arith.constant 0 : index
    %c0_1 = arith.constant 0 : index
    %0 = vector.load %arg2[%c0, %c0_0, %c0_1] : memref<1x8x32xbf16, #tpu.memory_space<vmem>>, vector<1x8x32xbf16>
    %1 = vector.shape_cast %0 : vector<1x8x32xbf16> to vector<8x32xbf16>
    %c0_2 = arith.constant 0 : index
    %c0_3 = arith.constant 0 : index
    %2 = vector.load %arg6[%c0_2, %c0_3] : memref<64x32xbf16, #tpu.memory_space<vmem>>, vector<32x32xbf16>
    %cst = arith.constant dense<0.000000e+00> : vector<8x32xf32>
    %3 = tpu.matmul %1, %2, %cst {dimension_numbers = #tpu.dot_dimension_numbers<[1], [0], [0], [1], [0, 0, 1, 1], [], []>} : vector<8x32xbf16>, vector<32x32xbf16>, vector<8x32xf32> -> vector<8x32xf32>
    %c0_4 = arith.constant 0 : index
    %c0_5 = arith.constant 0 : index
    %c0_6 = arith.constant 0 : index
    %4 = vector.load %arg3[%c0_4, %c0_5, %c0_6] : memref<1x8x32xbf16, #tpu.memory_space<vmem>>, vector<1x8x32xbf16>
    %5 = vector.shape_cast %4 : vector<1x8x32xbf16> to vector<8x32xbf16>
    %c32 = arith.constant 32 : index
    %c0_7 = arith.constant 0 : index
    %6 = vector.load %arg6[%c32, %c0_7] : memref<64x32xbf16, #tpu.memory_space<vmem>>, vector<32x32xbf16>
    %cst_8 = arith.constant dense<0.000000e+00> : vector<8x32xf32>
    %7 = tpu.matmul %5, %6, %cst_8 {dimension_numbers = #tpu.dot_dimension_numbers<[1], [0], [0], [1], [0, 0, 1, 1], [], []>} : vector<8x32xbf16>, vector<32x32xbf16>, vector<8x32xf32> -> vector<8x32xf32>
    %8 = arith.addf %3, %7 : vector<8x32xf32>
    %c0_9 = arith.constant 0 : index
    %c0_10 = arith.constant 0 : index
    %9 = vector.load %arg7[%c0_9, %c0_10] : memref<1x32xf32, #tpu.memory_space<vmem>>, vector<1x32xf32>
    %10 = vector.broadcast %9 : vector<1x32xf32> to vector<8x32xf32>
    %11 = arith.addf %8, %10 : vector<8x32xf32>
    %c0_11 = arith.constant 0 : index
    %c0_12 = arith.constant 0 : index
    %c0_13 = arith.constant 0 : index
    %c0_14 = arith.constant 0 : index
    %12 = vector.load %arg4[%c0_11, %c0_12, %c0_13, %c0_14] : memref<1x8x8x32xbf16, #tpu.memory_space<vmem>>, vector<1x8x8x32xbf16>
    %13 = vector.shape_cast %12 : vector<1x8x8x32xbf16> to vector<8x8x32xbf16>
    %14 = arith.extf %13 : vector<8x8x32xbf16> to vector<8x8x32xf32>
    %15 = vector.shape_cast %11 : vector<8x32xf32> to vector<8x1x32xf32>
    %16 = vector.broadcast %15 : vector<8x1x32xf32> to vector<8x8x32xf32>
    %17 = arith.mulf %16, %14 : vector<8x8x32xf32>
    %cst_15 = arith.constant dense<0.000000e+00> : vector<8x8xf32>
    %18 = vector.multi_reduction <add>, %17, %cst_15 [2] : vector<8x8x32xf32> to vector<8x8xf32>
    %c0_16 = arith.constant 0 : index
    %c0_17 = arith.constant 0 : index
    %19 = vector.load %arg5[%c0_16, %c0_17] : memref<8x8xf32, #tpu.memory_space<vmem>>, vector<8x8xf32>
    %cst_18 = arith.constant 0.000000e+00 : f32
    %20 = vector.broadcast %cst_18 : f32 to vector<8x8xf32>
    %21 = arith.cmpf ogt, %19, %20 : vector<8x8xf32>
    %cst_19 = arith.constant -1.000000e+30 : f32
    %22 = vector.broadcast %cst_19 : f32 to vector<8x8xf32>
    %23 = arith.select %21, %18, %22 : vector<8x8xi1>, vector<8x8xf32>
    %cst_20 = arith.constant dense<0xFF800000> : vector<8xf32>
    %24 = vector.multi_reduction <maximumf>, %23, %cst_20 [1] : vector<8x8xf32> to vector<8xf32>
    %25 = vector.shape_cast %24 : vector<8xf32> to vector<8x1xf32>
    %26 = vector.broadcast %25 : vector<8x1xf32> to vector<8x8xf32>
    %27 = arith.subf %23, %26 : vector<8x8xf32>
    %28 = math.exp %27 : vector<8x8xf32>
    %cst_21 = arith.constant 0.000000e+00 : f32
    %29 = vector.broadcast %cst_21 : f32 to vector<8x8xf32>
    %30 = arith.select %21, %28, %29 : vector<8x8xi1>, vector<8x8xf32>
    %cst_22 = arith.constant dense<0.000000e+00> : vector<8xf32>
    %31 = vector.multi_reduction <add>, %30, %cst_22 [1] : vector<8x8xf32> to vector<8xf32>
    %32 = vector.shape_cast %31 : vector<8xf32> to vector<8x1xf32>
    %cst_23 = arith.constant 9.99999968E-21 : f32
    %33 = vector.broadcast %cst_23 : f32 to vector<8x1xf32>
    %34 = arith.maximumf %32, %33 : vector<8x1xf32>
    %35 = tpu.reciprocal %34 {approx = true} : vector<8x1xf32> -> vector<8x1xf32>
    %36 = vector.broadcast %35 : vector<8x1xf32> to vector<8x8xf32>
    %37 = arith.mulf %30, %36 : vector<8x8xf32>
    %38 = vector.shape_cast %37 : vector<8x8xf32> to vector<8x8x1xf32>
    %39 = vector.broadcast %38 : vector<8x8x1xf32> to vector<8x8x32xf32>
    %40 = arith.mulf %39, %14 : vector<8x8x32xf32>
    %cst_24 = arith.constant dense<0.000000e+00> : vector<8x32xf32>
    %41 = vector.multi_reduction <add>, %40, %cst_24 [1] : vector<8x8x32xf32> to vector<8x32xf32>
    %c0_i32 = arith.constant 0 : i32
    %42 = arith.cmpi eq, %arg1, %c0_i32 : i32
    %43 = arith.extui %42 : i1 to i32
    %c0_i32_25 = arith.constant 0 : i32
    %44 = arith.cmpi ne, %43, %c0_i32_25 : i32
    scf.if %44 {
      %cst_31 = arith.constant 0.000000e+00 : f32
      %51 = vector.broadcast %cst_31 : f32 to vector<8x32xf32>
      %c0_32 = arith.constant 0 : index
      %c0_33 = arith.constant 0 : index
      %52 = vector.load %arg8[%c0_32, %c0_33] : memref<8x32xf32, #tpu.memory_space<vmem>>, vector<8x32xf32>
      tpu.vector_store %arg8[%c0_32, %c0_33], %51 {strides = array<i32>} : memref<8x32xf32, #tpu.memory_space<vmem>>, vector<8x32xf32>,
    } else {
    }
    %c0_26 = arith.constant 0 : index
    %c0_27 = arith.constant 0 : index
    %45 = vector.load %arg8[%c0_26, %c0_27] : memref<8x32xf32, #tpu.memory_space<vmem>>, vector<8x32xf32>
    %46 = arith.addf %45, %41 : vector<8x32xf32>
    %c0_28 = arith.constant 0 : index
    %c0_29 = arith.constant 0 : index
    %47 = vector.load %arg8[%c0_28, %c0_29] : memref<8x32xf32, #tpu.memory_space<vmem>>, vector<8x32xf32>
    tpu.vector_store %arg8[%c0_28, %c0_29], %46 {strides = array<i32>} : memref<8x32xf32, #tpu.memory_space<vmem>>, vector<8x32xf32>,
    %c2_i32 = arith.constant 2 : i32
    %48 = arith.cmpi eq, %arg1, %c2_i32 : i32
    %49 = arith.extui %48 : i1 to i32
    %c0_i32_30 = arith.constant 0 : i32
    %50 = arith.cmpi ne, %49, %c0_i32_30 : i32
    scf.if %50 {
      %c0_31 = arith.constant 0 : index
      %c0_32 = arith.constant 0 : index
      %51 = vector.load %arg8[%c0_31, %c0_32] : memref<8x32xf32, #tpu.memory_space<vmem>>, vector<8x32xf32>
      %cst_33 = arith.constant 0.333333343 : f32
      %52 = vector.broadcast %cst_33 : f32 to vector<8x32xf32>
      %53 = arith.mulf %51, %52 : vector<8x32xf32>
      %c0_34 = arith.constant 0 : index
      %c0_35 = arith.constant 0 : index
      %54 = vector.load %arg8[%c0_34, %c0_35] : memref<8x32xf32, #tpu.memory_space<vmem>>, vector<8x32xf32>
      tpu.vector_store %arg8[%c0_34, %c0_35], %53 {strides = array<i32>} : memref<8x32xf32, #tpu.memory_space<vmem>>, vector<8x32xf32>,
    } else {
    }
    return
  }
  func.func @transform_0(%arg0: i32, %arg1: i32) -> (i32, i32, i32) {
    %c0_i32 = arith.constant 0 : i32
    %c0_i32_0 = arith.constant 0 : i32
    return %arg1, %arg0, %c0_i32 : i32, i32, i32
  }
  func.func @transform_1(%arg0: i32, %arg1: i32) -> (i32, i32, i32) {
    %c0_i32 = arith.constant 0 : i32
    %c0_i32_0 = arith.constant 0 : i32
    return %arg1, %arg0, %c0_i32 : i32, i32, i32
  }
  func.func @transform_2(%arg0: i32, %arg1: i32) -> (i32, i32, i32, i32) {
    %c0_i32 = arith.constant 0 : i32
    %c0_i32_0 = arith.constant 0 : i32
    %c0_i32_1 = arith.constant 0 : i32
    return %arg1, %arg0, %c0_i32, %c0_i32_0 : i32, i32, i32, i32
  }
  func.func @transform_3(%arg0: i32, %arg1: i32) -> (i32, i32) {
    %c0_i32 = arith.constant 0 : i32
    %c0_i32_0 = arith.constant 0 : i32
    return %arg0, %c0_i32 : i32, i32
  }
  func.func @transform_4(%arg0: i32, %arg1: i32) -> (i32, i32) {
    %c0_i32 = arith.constant 0 : i32
    %c0_i32_0 = arith.constant 0 : i32
    %c0_i32_1 = arith.constant 0 : i32
    return %c0_i32, %c0_i32_0 : i32, i32
  }
  func.func @transform_5(%arg0: i32, %arg1: i32) -> (i32, i32) {
    %c0_i32 = arith.constant 0 : i32
    %c0_i32_0 = arith.constant 0 : i32
    %c0_i32_1 = arith.constant 0 : i32
    return %c0_i32, %c0_i32_0 : i32, i32
  }
  func.func @transform_6(%arg0: i32, %arg1: i32) -> (i32, i32) {
    %c0_i32 = arith.constant 0 : i32
    %c0_i32_0 = arith.constant 0 : i32
    return %arg0, %c0_i32 : i32, i32
  }
}

</mosaic_0001>

<llo_original>
// kernel: tpu_custom_call.1
$region0: #{tpu_custom_call.1}
  #allocation0 [shape = 'u32[]', space=smem, size = 0x4, offset = 0x4, fixed_abs, tag = 'smem constant byte address 0x4 - core index']
  #allocation1 [shape = 'u32[144,128]{1,0:T(1,128)}', space=vmem, size = 0x12000, scoped, tag = 'internal scratch']
  %s0 = inlined_call_operand.vmem [shape: bf16[3,8,32], index: 0, kind: input, shape index: {}]
  %s1 = inlined_call_operand.vmem [shape: bf16[3,8,32], index: 1, kind: input, shape index: {}]
  %s2 = inlined_call_operand.hbm [shape: bf16[3,8,8,32], index: 2, kind: input, shape index: {}]
  %s3 = inlined_call_operand.vmem [shape: f32[8,8], index: 3, kind: input, shape index: {}]
  %s4 = inlined_call_operand.vmem [shape: bf16[64,32], index: 4, kind: input, shape index: {}]
  %s5 = inlined_call_operand.vmem [shape: f32[1,32], index: 5, kind: input, shape index: {}]
  %s6 = inlined_call_operand.hbm [shape: f32[8,32], index: 6, kind: output, shape index: {}]
  %s7 = sld [smem:[#allocation0]]
  $region69: #{tpu_custom_call.1} parent=0
    _
  %s9 = ssub.s32 1, %s7
  %s10 = scalar_select 0, %s9, %s7
  $region1: #{tpu_custom_call.1} parent=0
    #allocation2 [shape = 'u8[32768]{0}', space=vmem, size = 0x8000, scoped, tag = 'input window, operand 2']
    #allocation3 [shape = 's32[2]{0}', space=sflag, size = 0x8, scoped, tag = 'scoped memory for tpu_custom_call.1']
    #allocation4 [shape = 's32[2]{0}', space=sflag, size = 0x8, scoped, tag = 'scoped memory for tpu_custom_call.1']
    #allocation5 [shape = 'u8[4096]{0}', space=vmem, size = 0x1000, scoped, tag = 'output window, operand 0, single buffered']
    %11 = vsyncpa [#allocation3], 0
    %s12 = scalar_lea.sflag [#allocation3], 1
    %13 = vsyncpa %s12, 0
    %14 = vsyncpa [#allocation4], 0
    loop: start=0, step=1, limit=5
    $region2: #{tpu_custom_call.1} parent=1 // loop_pre_header
      _
    $region3: #{tpu_custom_call.1} parent=1 // loop_header
      %s16 = sphi 0, %s20
      %p17 = scmp.ge.s32.totalorder %s16, 5
      %s23 = sphi 0, %s35
      %s24 = sphi 0, %s31
      %s25 = sphi 0, %s23
      %s26 = sphi 0, %s24
      %s27 = sphi 0, %s25
      %s28 = sphi 0, %s26
      %s40 = sphi 0, %s42
      %s43 = sphi 0, %s40
      %s44 = sphi 0, %s43
      %s60 = sphi 0, %s44
      %s68 = sphi 0, %s70
      %s71 = sphi 0, %s68
      %s72 = sphi 0, %s71
      %s88 = sphi 0, %s72
      %s96 = sphi 0, %s98
      %s99 = sphi 0, %s96
      %s100 = sphi 0, %s99
      %s116 = sphi 0, %s100
      %s122 = sphi 0, %s124
      %s125 = sphi 0, %s122
      %s126 = sphi 0, %s125
      %s142 = sphi 0, %s126
      %s146 = sphi 0, %s146
      %s148 = sphi 0, %s146
      %s149 = sphi 0, %s148
      %s163 = sphi 0, %s149
      %s167 = sphi 0, %s167
      %s169 = sphi 0, %s167
      %s170 = sphi 0, %s169
      %s184 = sphi 0, %s170
      %s190 = sphi 0, %s192
      %s193 = sphi 0, %s190
      %s194 = sphi 0, %s193
      %s210 = sphi 0, %s194
    $region4: #{tpu_custom_call.1} parent=1 // loop_header_branch
      %19 = sbr.rel (%p17) target = $region8
    $region5: #{tpu_custom_call.1} parent=1 // loop_body
      %s21 = ssub.s32 %s16, 1
      %s22 = ssub.s32 %s16, 2
      %s29 = sadd.s32 1, %s24
      %p30 = scmp.ge.s32.totalorder %s29, 3
      %s31 = scalar_select %p30, 0, %s29
      %s32 = sadd.s32 1, %s23
      %s33 = scalar_select %p30, %s32, %s23
      %p34 = scmp.ge.s32.totalorder %s33, 1
      %s35 = scalar_select %p34, 0, %s33
      %s36 = ssub.s32 %s24, %s31
      %s37 = ssub.s32 %s23, %s35
      %s38 = sor.u32 %s36, %s37
      %p39 = scmp.eq.s32.totalorder %s38, 0
      %s41 = sadd.s32 %s40, 1
      %s42 = scalar_select %p39, %s40, %s41
      %p45 = pneg %p39
      %p46 = scmp.eq.s32.totalorder %s16, 2
      %p47 = por %p45, %p46
      %p48 = scmp.ne.s32.totalorder %s40, %s43
      %p49 = scmp.eq.s32.totalorder %s16, 0
      %p50 = por %p48, %p49
      %p51 = scmp.ne.s32.totalorder %s40, %s43
      %p52 = scmp.eq.s32.totalorder %s21, 2
      %p53 = por %p51, %p52
      %p54 = scmp.ne.s32.totalorder %s43, %s44
      %p55 = scmp.eq.s32.totalorder %s21, 0
      %p56 = por %p54, %p55
      %p57 = scmp.ne.s32.totalorder %s43, %s44
      %p58 = scmp.eq.s32.totalorder %s22, 2
      %p59 = por %p57, %p58
      %p61 = scmp.ne.s32.totalorder %s44, %s60
      %p62 = scmp.eq.s32.totalorder %s22, 0
      %p63 = por %p61, %p62
      %s64 = ssub.s32 %s24, %s31
      %s65 = ssub.s32 %s23, %s35
      %s66 = sor.u32 %s64, %s65
      %p67 = scmp.eq.s32.totalorder %s66, 0
      %s69 = sadd.s32 %s68, 1
      %s70 = scalar_select %p67, %s68, %s69
      %p73 = pneg %p67
      %p74 = scmp.eq.s32.totalorder %s16, 2
      %p75 = por %p73, %p74
      %p76 = scmp.ne.s32.totalorder %s68, %s71
      %p77 = scmp.eq.s32.totalorder %s16, 0
      %p78 = por %p76, %p77
      %p79 = scmp.ne.s32.totalorder %s68, %s71
      %p80 = scmp.eq.s32.totalorder %s21, 2
      %p81 = por %p79, %p80
      %p82 = scmp.ne.s32.totalorder %s71, %s72
      %p83 = scmp.eq.s32.totalorder %s21, 0
      %p84 = por %p82, %p83
      %p85 = scmp.ne.s32.totalorder %s71, %s72
      %p86 = scmp.eq.s32.totalorder %s22, 2
      %p87 = por %p85, %p86
      %p89 = scmp.ne.s32.totalorder %s72, %s88
      %p90 = scmp.eq.s32.totalorder %s22, 0
      %p91 = por %p89, %p90
      %s92 = ssub.s32 %s24, %s31
      %s93 = ssub.s32 %s23, %s35
      %s94 = sor.u32 %s92, %s93
      %p95 = scmp.eq.s32.totalorder %s94, 0
      %s97 = sadd.s32 %s96, 1
      %s98 = scalar_select %p95, %s96, %s97
      %p101 = pneg %p95
      %p102 = scmp.eq.s32.totalorder %s16, 2
      %p103 = por %p101, %p102
      %p104 = scmp.ne.s32.totalorder %s96, %s99
      %p105 = scmp.eq.s32.totalorder %s16, 0
      %p106 = por %p104, %p105
      %p107 = scmp.ne.s32.totalorder %s96, %s99
      %p108 = scmp.eq.s32.totalorder %s21, 2
      %p109 = por %p107, %p108
      %p110 = scmp.ne.s32.totalorder %s99, %s100
      %p111 = scmp.eq.s32.totalorder %s21, 0
      %p112 = por %p110, %p111
      %p113 = scmp.ne.s32.totalorder %s99, %s100
      %p114 = scmp.eq.s32.totalorder %s22, 2
      %p115 = por %p113, %p114
      %p117 = scmp.ne.s32.totalorder %s100, %s116
      %p118 = scmp.eq.s32.totalorder %s22, 0
      %p119 = por %p117, %p118
      %s120 = ssub.s32 %s23, %s35
      %p121 = scmp.eq.s32.totalorder %s120, 0
      %s123 = sadd.s32 %s122, 1
      %s124 = scalar_select %p121, %s122, %s123
      %p127 = pneg %p121
      %p128 = scmp.eq.s32.totalorder %s16, 2
      %p129 = por %p127, %p128
      %p130 = scmp.ne.s32.totalorder %s122, %s125
      %p131 = scmp.eq.s32.totalorder %s16, 0
      %p132 = por %p130, %p131
      %p133 = scmp.ne.s32.totalorder %s122, %s125
      %p134 = scmp.eq.s32.totalorder %s21, 2
      %p135 = por %p133, %p134
      %p136 = scmp.ne.s32.totalorder %s125, %s126
      %p137 = scmp.eq.s32.totalorder %s21, 0
      %p138 = por %p136, %p137
      %p139 = scmp.ne.s32.totalorder %s125, %s126
      %p140 = scmp.eq.s32.totalorder %s22, 2
      %p141 = por %p139, %p140
      %p143 = scmp.ne.s32.totalorder %s126, %s142
      %p144 = scmp.eq.s32.totalorder %s22, 0
      %p145 = por %p143, %p144
      %s147 = sadd.s32 %s146, 1
      %p150 = scmp.eq.s32.totalorder %s16, 2
      %p151 = scmp.ne.s32.totalorder %s146, %s148
      %p152 = scmp.eq.s32.totalorder %s16, 0
      %p153 = por %p151, %p152
      %p154 = scmp.ne.s32.totalorder %s146, %s148
      %p155 = scmp.eq.s32.totalorder %s21, 2
      %p156 = por %p154, %p155
      %p157 = scmp.ne.s32.totalorder %s148, %s149
      %p158 = scmp.eq.s32.totalorder %s21, 0
      %p159 = por %p157, %p158
      %p160 = scmp.ne.s32.totalorder %s148, %s149
      %p161 = scmp.eq.s32.totalorder %s22, 2
      %p162 = por %p160, %p161
      %p164 = scmp.ne.s32.totalorder %s149, %s163
      %p165 = scmp.eq.s32.totalorder %s22, 0
      %p166 = por %p164, %p165
      %s168 = sadd.s32 %s167, 1
      %p171 = scmp.eq.s32.totalorder %s16, 2
      %p172 = scmp.ne.s32.totalorder %s167, %s169
      %p173 = scmp.eq.s32.totalorder %s16, 0
      %p174 = por %p172, %p173
      %p175 = scmp.ne.s32.totalorder %s167, %s169
      %p176 = scmp.eq.s32.totalorder %s21, 2
      %p177 = por %p175, %p176
      %p178 = scmp.ne.s32.totalorder %s169, %s170
      %p179 = scmp.eq.s32.totalorder %s21, 0
      %p180 = por %p178, %p179
      %p181 = scmp.ne.s32.totalorder %s169, %s170
      %p182 = scmp.eq.s32.totalorder %s22, 2
      %p183 = por %p181, %p182
      %p185 = scmp.ne.s32.totalorder %s170, %s184
      %p186 = scmp.eq.s32.totalorder %s22, 0
      %p187 = por %p185, %p186
      %s188 = ssub.s32 %s23, %s35
      %p189 = scmp.eq.s32.totalorder %s188, 0
      %s191 = sadd.s32 %s190, 1
      %s192 = scalar_select %p189, %s190, %s191
      %p195 = pneg %p189
      %p196 = scmp.eq.s32.totalorder %s16, 2
      %p197 = por %p195, %p196
      %p198 = scmp.ne.s32.totalorder %s190, %s193
      %p199 = scmp.eq.s32.totalorder %s16, 0
      %p200 = por %p198, %p199
      %p201 = scmp.ne.s32.totalorder %s190, %s193
      %p202 = scmp.eq.s32.totalorder %s21, 2
      %p203 = por %p201, %p202
      %p204 = scmp.ne.s32.totalorder %s193, %s194
      %p205 = scmp.eq.s32.totalorder %s21, 0
      %p206 = por %p204, %p205
      %p207 = scmp.ne.s32.totalorder %s193, %s194
      %p208 = scmp.eq.s32.totalorder %s22, 2
      %p209 = por %p207, %p208
      %p211 = scmp.ne.s32.totalorder %s194, %s210
      %p212 = scmp.eq.s32.totalorder %s22, 0
      %p213 = por %p211, %p212
      %p214 = scmp.le.s32.totalorder 1, %s16
      %p215 = scmp.lt.s32.totalorder %s16, 4
      %p216 = pnand %p214, %p215
      %p217 = pneg %p216
      // Predicated region
      $region9: #{tpu_custom_call.1} parent=5 // pred_check
        _
      $region10: #{tpu_custom_call.1} parent=5 // pred_check_branch
        %219 = sbr.rel (%p216) target = $region12
      $region11: #{tpu_custom_call.1} parent=5 // pred_region
        %s220 = ssub.s32 %s16, 1
        // Predicated region
        $region13: #{tpu_custom_call.1} parent=11 // pred_check
          %p221 = pneg %p138
        $region14: #{tpu_custom_call.1} parent=11 // pred_check_branch
          %223 = sbr.rel (%p221) target = $region16
        $region15: #{tpu_custom_call.1} parent=11 // pred_region
          %p224 = scmp.lt.s32.totalorder %s25, 0
          %s225 = scalar_select %p224, %s25, 0
          %s226 = smul.addr %s225, 8
          %s227 = scalar_lea.vmem %s3, %s226
        $region16: #{tpu_custom_call.1} parent=11 // pred_fallthru
          _
        // Predicated region
        $region17: #{tpu_custom_call.1} parent=11 // pred_check
          %p228 = pneg %p159
        $region18: #{tpu_custom_call.1} parent=11 // pred_check_branch
          %230 = sbr.rel (%p228) target = $region20
        $region19: #{tpu_custom_call.1} parent=11 // pred_region
          _
        $region20: #{tpu_custom_call.1} parent=11 // pred_fallthru
          _
        // Predicated region
        $region21: #{tpu_custom_call.1} parent=11 // pred_check
          %p231 = pneg %p180
        $region22: #{tpu_custom_call.1} parent=11 // pred_check_branch
          %233 = sbr.rel (%p231) target = $region24
        $region23: #{tpu_custom_call.1} parent=11 // pred_region
          _
        $region24: #{tpu_custom_call.1} parent=11 // pred_fallthru
          _
      $region12: #{tpu_custom_call.1} parent=5 // pred_fallthru
        _
      %p234 = scmp.lt.s32.totalorder %s16, 3
      // Predicated region
      $region25: #{tpu_custom_call.1} parent=5 // pred_check
        %p235 = pneg %p234
      $region26: #{tpu_custom_call.1} parent=5 // pred_check_branch
        %237 = sbr.rel (%p235) target = $region28
      $region27: #{tpu_custom_call.1} parent=5 // pred_region
        // Predicated region
        $region29: #{tpu_custom_call.1} parent=27 // pred_check
          %p238 = pneg %p50
        $region30: #{tpu_custom_call.1} parent=27 // pred_check_branch
          %240 = sbr.rel (%p238) target = $region32
        $region31: #{tpu_custom_call.1} parent=27 // pred_region
          %p241 = scmp.lt.s32.totalorder %s24, 2
          %s242 = scalar_select %p241, %s24, 2
          %p243 = scmp.lt.s32.totalorder %s23, 0
          %s244 = scalar_select %p243, %s23, 0
          %s245 = sadd.s32 %s244, %s242
          %s246 = smul.addr %s245, 4
          %s247 = scalar_lea.vmem %s0, %s246
        $region32: #{tpu_custom_call.1} parent=27 // pred_fallthru
          _
        // Predicated region
        $region33: #{tpu_custom_call.1} parent=27 // pred_check
          %p248 = pneg %p78
        $region34: #{tpu_custom_call.1} parent=27 // pred_check_branch
          %250 = sbr.rel (%p248) target = $region36
        $region35: #{tpu_custom_call.1} parent=27 // pred_region
          %p251 = scmp.lt.s32.totalorder %s24, 2
          %s252 = scalar_select %p251, %s24, 2
          %p253 = scmp.lt.s32.totalorder %s23, 0
          %s254 = scalar_select %p253, %s23, 0
          %s255 = sadd.s32 %s254, %s252
          %s256 = smul.addr %s255, 4
          %s257 = scalar_lea.vmem %s1, %s256
        $region36: #{tpu_custom_call.1} parent=27 // pred_fallthru
          _
        // Predicated region
        $region37: #{tpu_custom_call.1} parent=27 // pred_check
          %p258 = pneg %p106
        $region38: #{tpu_custom_call.1} parent=27 // pred_check_branch
          %260 = sbr.rel (%p258) target = $region40
        $region39: #{tpu_custom_call.1} parent=27 // pred_region
          %s261 = sand.u32 %s96, 1
          %s262 = scalar_lea.sflag [#allocation3], %s261
          %s263 = sand.u32 %s96, 1
          %s264 = smul.addr %s263, 32
          %s265 = scalar_lea.vmem [#allocation2], %s264
          %s266 = smul.u32 8, %s23
          %s268 = ssub.s32 512, 512
          %269 = vsyncadd %s262, %s268
          %s270 = smul.addr %s24, 8
          %s271 = sadd.s32 %s266, %s270
          %s272 = smul.addr %s271, 64
          %s273 = scalar_lea.hbm %s2, %s272
          %s274 = sshll.u32 %s265, 4
          %s275 = int_to_ptr.vmem [resolvable:$true] %s274
          %280 = dma.hbm_to_vmem [thread:$0]  %s273, 512, %s275, %s262, 64, 64, 4
        $region40: #{tpu_custom_call.1} parent=27 // pred_fallthru
          _
      $region28: #{tpu_custom_call.1} parent=5 // pred_fallthru
        _
      %p281 = scmp.le.s32.totalorder 1, %s16
      %p282 = scmp.lt.s32.totalorder %s16, 4
      %p283 = pnand %p281, %p282
      %p284 = pneg %p283
      // Predicated region
      $region41: #{tpu_custom_call.1} parent=5 // pred_check
        _
      $region42: #{tpu_custom_call.1} parent=5 // pred_check_branch
        %286 = sbr.rel (%p283) target = $region44
      $region43: #{tpu_custom_call.1} parent=5 // pred_region
        %s287 = ssub.s32 %s16, 1
        %s288 = sand.u32 %s99, 1
        %s289 = scalar_lea.sflag [#allocation3], %s288
        %s290 = sand.u32 %s99, 1
        %s291 = smul.addr %s290, 32
        %s292 = scalar_lea.vmem [#allocation2], %s291
        // Predicated region
        $region45: #{tpu_custom_call.1} parent=43 // pred_check
          %p293 = pneg %p112
        $region46: #{tpu_custom_call.1} parent=43 // pred_check_branch
          %295 = sbr.rel (%p293) target = $region48
        $region47: #{tpu_custom_call.1} parent=43 // pred_region
          %296 = dma.done %s289, 512
        $region48: #{tpu_custom_call.1} parent=43 // pred_fallthru
          _
        %p297 = scmp.lt.s32.totalorder %s26, 2
        %s298 = scalar_select %p297, %s26, 2
        %p299 = scmp.lt.s32.totalorder %s25, 0
        %s300 = scalar_select %p299, %s25, 0
        %s301 = sadd.s32 %s300, %s298
        %s302 = smul.addr %s301, 4
        %s303 = scalar_lea.vmem %s0, %s302
        %p304 = pneg %p56
        %p305 = pneg %p53
        %p306 = scmp.lt.s32.totalorder %s26, 2
        %s307 = scalar_select %p306, %s26, 2
        %p308 = scmp.lt.s32.totalorder %s25, 0
        %s309 = scalar_select %p308, %s25, 0
        %s310 = sadd.s32 %s309, %s307
        %s311 = smul.addr %s310, 4
        %s312 = scalar_lea.vmem %s1, %s311
        %p313 = pneg %p84
        %p314 = pneg %p81
        %s315 = sand.u32 %s99, 1
        %s316 = scalar_lea.sflag [#allocation3], %s315
        %s317 = sand.u32 %s99, 1
        %s318 = smul.addr %s317, 32
        %s319 = scalar_lea.vmem [#allocation2], %s318
        %p320 = pneg %p112
        %p321 = pneg %p109
        %p322 = scmp.lt.s32.totalorder %s25, 0
        %s323 = scalar_select %p322, %s25, 0
        %s324 = smul.addr %s323, 8
        %s325 = scalar_lea.vmem %s3, %s324
        %p326 = pneg %p138
        %p327 = pneg %p135
        %p328 = pneg %p159
        %p329 = pneg %p156
        %p330 = pneg %p180
        %p331 = pneg %p177
        %p332 = pneg %p206
        %p333 = pneg %p203
        %p334 = scmp.lt.s32.totalorder %s26, 2
        %s335 = scalar_select %p334, %s26, 2
        %p336 = scmp.lt.s32.totalorder %s25, 0
        %s337 = scalar_select %p336, %s25, 0
        %s338 = sadd.s32 %s337, %s335
        %s339 = smul.addr %s338, 4
        %s340 = scalar_lea.vmem %s0, %s339
        %p341 = scmp.lt.s32.totalorder %s26, 2
        %s342 = scalar_select %p341, %s26, 2
        %p343 = scmp.lt.s32.totalorder %s25, 0
        %s344 = scalar_select %p343, %s25, 0
        %s345 = sadd.s32 %s344, %s342
        %s346 = smul.addr %s345, 4
        %s347 = scalar_lea.vmem %s1, %s346
        %s348 = smul.u32 8, %s25
        %p349 = scmp.lt.s32.totalorder %s25, 0
        %s350 = scalar_select %p349, %s25, 0
        %s351 = smul.addr %s350, 8
        %s352 = scalar_lea.vmem %s3, %s351
        %v354 = vld [vmem:[%s340] sm:$0xf]
        %v355 = vld [vmem:[%s4] sm:$0xf]
        %v356 = vld [vmem:[%s4 + $0x4] sm:$0xf]
        %v357 = vld [vmem:[%s4 + $0x8] sm:$0xf]
        %v358 = vld [vmem:[%s4 + $0xc] sm:$0xf]
        %v359 = vld [vmem:[%s347] sm:$0xf]
        %v360 = vld [vmem:[%s4 + $0x10] sm:$0xf]
        %v361 = vld [vmem:[%s4 + $0x14] sm:$0xf]
        %v362 = vld [vmem:[%s4 + $0x18] sm:$0xf]
        %v363 = vld [vmem:[%s4 + $0x1c] sm:$0xf]
        %v368 = vunpack.c.l.b16 %v360
        %v369 = vunpack.c.l.b16 %v361
        %v370 = vunpack.c.l.b16 %v362
        %v371 = vunpack.c.l.b16 %v363
        %v372 = vpack.c.b16 %v369, %v368
        %v373 = vpack.c.b16 %v371, %v370
        %vm376 = vcmask 261120
        %v378 = vsel %vm376, %v359, 0
        %380 = vmatprep.subr.bf16.mxu0 0
        %381 = vmatpush1.bf16.msra.mxu0 %v372
        %382 = vmatprep.subr.bf16.mxu0 0
        %383 = vmatpush1.bf16.msra.mxu0 %v373
        %384 = vmatprep.subr.bf16.mxu0 0
        %385 = vmatpush1.bf16.msra.mxu0 0
        %386 = vmatprep.subr.bf16.mxu0 0
        %387 = vmatpush1.bf16.msra.mxu0 0
        %388 = vmatprep.subr.bf16.mxu0 0
        %389 = vmatpush1.bf16.msra.mxu0 0
        %390 = vmatprep.subr.bf16.mxu0 0
        %391 = vmatpush1.bf16.msra.mxu0 0
        %392 = vmatprep.subr.bf16.mxu0 0
        %393 = vmatpush1.bf16.msra.mxu0 0
        %394 = vmatprep.subr.bf16.mxu0 0
        %395 = vmatpush1.bf16.msra.mxu0 0
        %396 = vmatprep.subr.bf16.mxu0 0
        %397 = vmatpush1.bf16.msra.mxu0 0
        %398 = vmatprep.subr.bf16.mxu0 0
        %399 = vmatpush1.bf16.msra.mxu0 0
        %400 = vmatprep.subr.bf16.mxu0 0
        %401 = vmatpush1.bf16.msra.mxu0 0
        %402 = vmatprep.subr.bf16.mxu0 0
        %403 = vmatpush1.bf16.msra.mxu0 0
        %404 = vmatprep.subr.bf16.mxu0 0
        %405 = vmatpush1.bf16.msra.mxu0 0
        %406 = vmatprep.subr.bf16.mxu0 0
        %407 = vmatpush1.bf16.msra.mxu0 0
        %408 = vmatprep.subr.bf16.mxu0 0
        %409 = vmatpush1.bf16.msra.mxu0 0
        %410 = vmatprep.subr.bf16.mxu0 0
        %411 = vmatpush1.bf16.msra.mxu0 0
        %412 = vmatprep.mubr.bf16.mxu0 0
        %413 = vmatmul.mubr.bf16.gmra.mrb[0].mxu0 %v378
        %v414 = vpop.f32.mrb[0].mxu0
        %v415 = vadd.f32 0.0, %v414
        %v416 = vpop.f32.mrb[0].mxu0
        %v417 = vpop.f32.mrb[0].mxu0
        %v418 = vpop.f32.mrb[0].mxu0
        %419 = vdwg.mxu0
        %v424 = vunpack.c.l.b16 %v355
        %v425 = vunpack.c.l.b16 %v356
        %v426 = vunpack.c.l.b16 %v357
        %v427 = vunpack.c.l.b16 %v358
        %v428 = vpack.c.b16 %v425, %v424
        %v429 = vpack.c.b16 %v427, %v426
        %v433 = vsel %vm376, %v354, 0
        %435 = vmatprep.subr.bf16.mxu0 0
        %436 = vmatpush1.bf16.msra.mxu0 %v428
        %437 = vmatprep.subr.bf16.mxu0 0
        %438 = vmatpush1.bf16.msra.mxu0 %v429
        %439 = vmatprep.subr.bf16.mxu0 0
        %440 = vmatpush1.bf16.msra.mxu0 0
        %441 = vmatprep.subr.bf16.mxu0 0
        %442 = vmatpush1.bf16.msra.mxu0 0
        %443 = vmatprep.subr.bf16.mxu0 0
        %444 = vmatpush1.bf16.msra.mxu0 0
        %445 = vmatprep.subr.bf16.mxu0 0
        %446 = vmatpush1.bf16.msra.mxu0 0
        %447 = vmatprep.subr.bf16.mxu0 0
        %448 = vmatpush1.bf16.msra.mxu0 0
        %449 = vmatprep.subr.bf16.mxu0 0
        %450 = vmatpush1.bf16.msra.mxu0 0
        %451 = vmatprep.subr.bf16.mxu0 0
        %452 = vmatpush1.bf16.msra.mxu0 0
        %453 = vmatprep.subr.bf16.mxu0 0
        %454 = vmatpush1.bf16.msra.mxu0 0
        %455 = vmatprep.subr.bf16.mxu0 0
        %456 = vmatpush1.bf16.msra.mxu0 0
        %457 = vmatprep.subr.bf16.mxu0 0
        %458 = vmatpush1.bf16.msra.mxu0 0
        %459 = vmatprep.subr.bf16.mxu0 0
        %460 = vmatpush1.bf16.msra.mxu0 0
        %461 = vmatprep.subr.bf16.mxu0 0
        %462 = vmatpush1.bf16.msra.mxu0 0
        %463 = vmatprep.subr.bf16.mxu0 0
        %464 = vmatpush1.bf16.msra.mxu0 0
        %465 = vmatprep.subr.bf16.mxu0 0
        %466 = vmatpush1.bf16.msra.mxu0 0
        %467 = vmatprep.mubr.bf16.mxu0 0
        %468 = vmatmul.mubr.bf16.gmra.mrb[0].mxu0 %v433
        %v469 = vpop.f32.mrb[0].mxu0
        %v470 = vadd.f32 %v415, %v469
        %v471 = vpop.f32.mrb[0].mxu0
        %v472 = vpop.f32.mrb[0].mxu0
        %v473 = vpop.f32.mrb[0].mxu0
        %474 = vdwg.mxu0
        %v475 = vld [vmem:[%s5] sm:$0x1]
        %v477 = vlaneseq
        %v478 = vshrl.u32 %v477, 7
        %v479 = vsub.s32 0, %v478
        %v480 = vrot.slane %v475, %v479
        %v482 = vadd.f32 %v470, %v480
        %v483 = vld [vmem:[%s292] sm:$0xf]
        %v484 = vld [vmem:[%s292 + $0x4] sm:$0xf]
        %v485 = vld [vmem:[%s292 + $0x8] sm:$0xf]
        %v486 = vld [vmem:[%s292 + $0xc] sm:$0xf]
        %v487 = vld [vmem:[%s292 + $0x10] sm:$0xf]
        %v488 = vld [vmem:[%s292 + $0x14] sm:$0xf]
        %v489 = vld [vmem:[%s292 + $0x18] sm:$0xf]
        %v490 = vld [vmem:[%s292 + $0x1c] sm:$0xf]
        %v491 = vunpack.c.l.bf16 %v483
        %v492 = vunpack.c.l.bf16 %v484
        %v493 = vunpack.c.l.bf16 %v485
        %v494 = vunpack.c.l.bf16 %v486
        %v495 = vunpack.c.l.bf16 %v487
        %v496 = vunpack.c.l.bf16 %v488
        %v497 = vunpack.c.l.bf16 %v489
        %v498 = vunpack.c.l.bf16 %v490
        %v500 = vcombine.high %v482, %v482
        %v502 = vunpack.c.l.s4 1966171168
        %v503 = vunpack.c.0.s8 %v502
        %v504 = vlaneseq
        %v505 = vshrl.u32 %v504, 7
        %v506 = vsub.s32 %v503, %v505
        %v507 = vrot.slane %v482, %v506
        %v509 = vunpack.c.l.s4 1966171168
        %v510 = vunpack.c.0.s8 %v509
        %v511 = vlaneseq
        %v512 = vshrl.u32 %v511, 7
        %v513 = vsub.s32 %v510, %v512
        %v514 = vrot.slane %v500, %v513
        %v515 = vcombine.high %v507, %v507
        %v516 = vcombine.high %v514, %v514
        %v518 = vunpack.c.l.s4 1966171168
        %v519 = vunpack.c.0.s8 %v518
        %v520 = vlaneseq
        %v521 = vshrl.u32 %v520, 7
        %v522 = vsub.s32 %v519, %v521
        %v523 = vrot.slane %v507, %v522
        %v525 = vunpack.c.l.s4 1966171168
        %v526 = vunpack.c.0.s8 %v525
        %v527 = vlaneseq
        %v528 = vshrl.u32 %v527, 7
        %v529 = vsub.s32 %v526, %v528
        %v530 = vrot.slane %v514, %v529
        %v532 = vunpack.c.l.s4 1966171168
        %v533 = vunpack.c.0.s8 %v532
        %v534 = vlaneseq
        %v535 = vshrl.u32 %v534, 7
        %v536 = vsub.s32 %v533, %v535
        %v537 = vrot.slane %v515, %v536
        %v539 = vunpack.c.l.s4 1966171168
        %v540 = vunpack.c.0.s8 %v539
        %v541 = vlaneseq
        %v542 = vshrl.u32 %v541, 7
        %v543 = vsub.s32 %v540, %v542
        %v544 = vrot.slane %v516, %v543
        %v545 = vcombine.high %v523, %v523
        %v546 = vcombine.high %v530, %v530
        %v547 = vcombine.high %v537, %v537
        %v548 = vcombine.high %v544, %v544
        %v549 = vlaneseq
        %v550 = vshrl.u32 %v549, 7
        %v551 = vsub.s32 0, %v550
        %v552 = vrot.slane %v523, %v551
        %v553 = vlaneseq
        %v554 = vshrl.u32 %v553, 7
        %v555 = vsub.s32 0, %v554
        %v556 = vrot.slane %v537, %v555
        %v557 = vlaneseq
        %v558 = vshrl.u32 %v557, 7
        %v559 = vsub.s32 0, %v558
        %v560 = vrot.slane %v545, %v559
        %v561 = vlaneseq
        %v562 = vshrl.u32 %v561, 7
        %v563 = vsub.s32 0, %v562
        %v564 = vrot.slane %v547, %v563
        %v565 = vlaneseq
        %v566 = vshrl.u32 %v565, 7
        %v567 = vsub.s32 0, %v566
        %v568 = vrot.slane %v530, %v567
        %v569 = vlaneseq
        %v570 = vshrl.u32 %v569, 7
        %v571 = vsub.s32 0, %v570
        %v572 = vrot.slane %v544, %v571
        %v573 = vlaneseq
        %v574 = vshrl.u32 %v573, 7
        %v575 = vsub.s32 0, %v574
        %v576 = vrot.slane %v546, %v575
        %v577 = vlaneseq
        %v578 = vshrl.u32 %v577, 7
        %v579 = vsub.s32 0, %v578
        %v580 = vrot.slane %v548, %v579
        %v589 = vmul.f32 %v552, %v491
        %v590 = vmul.f32 %v556, %v492
        %v591 = vmul.f32 %v560, %v493
        %v592 = vmul.f32 %v564, %v494
        %v593 = vmul.f32 %v568, %v495
        %v594 = vmul.f32 %v572, %v496
        %v595 = vmul.f32 %v576, %v497
        %v596 = vmul.f32 %v580, %v498
        %v597 = vsel %vm376, %v589, 0.0
        %598 = vadd.xlane.f32.xlu0 %v597
        %v599 = vpop.xlane.xlu0 %598
        %v600 = vsel %vm376, %v590, 0.0
        %601 = vadd.xlane.f32.xlu0 %v600
        %v602 = vpop.xlane.xlu0 %601
        %v603 = vsel %vm376, %v591, 0.0
        %604 = vadd.xlane.f32.xlu0 %v603
        %v605 = vpop.xlane.xlu0 %604
        %v606 = vsel %vm376, %v592, 0.0
        %607 = vadd.xlane.f32.xlu0 %v606
        %v608 = vpop.xlane.xlu0 %607
        %v609 = vsel %vm376, %v593, 0.0
        %610 = vadd.xlane.f32.xlu0 %v609
        %v611 = vpop.xlane.xlu0 %610
        %v612 = vsel %vm376, %v594, 0.0
        %613 = vadd.xlane.f32.xlu0 %v612
        %v614 = vpop.xlane.xlu0 %613
        %v615 = vsel %vm376, %v595, 0.0
        %616 = vadd.xlane.f32.xlu0 %v615
        %v617 = vpop.xlane.xlu0 %616
        %v618 = vsel %vm376, %v596, 0.0
        %619 = vadd.xlane.f32.xlu0 %v618
        %v620 = vpop.xlane.xlu0 %619
        %v621 = vld [vmem:[%s352] sm:$0xff]
        %vm622 = vcmp.gt.f32.partialorder %v621, 0.0
        %v631 = vlaneseq
        %v632 = vand.u32 %v631, 127
        %v633 = vlaneseq
        %v634 = vshrl.u32 %v633, 7
        %v635 = vsub.s32 %v632, %v634
        %v636 = vrot.slane %v599, %v635
        %v637 = vlaneseq
        %v638 = vshrl.u32 %v637, 7
        %v639 = vsub.s32 %v632, %v638
        %v640 = vrot.slane %v602, %v639
        %v641 = vlaneseq
        %v642 = vshrl.u32 %v641, 7
        %v643 = vsub.s32 %v632, %v642
        %v644 = vrot.slane %v605, %v643
        %v645 = vlaneseq
        %v646 = vshrl.u32 %v645, 7
        %v647 = vsub.s32 %v632, %v646
        %v648 = vrot.slane %v608, %v647
        %v649 = vlaneseq
        %v650 = vshrl.u32 %v649, 7
        %v651 = vsub.s32 %v632, %v650
        %v652 = vrot.slane %v611, %v651
        %v653 = vlaneseq
        %v654 = vshrl.u32 %v653, 7
        %v655 = vsub.s32 %v632, %v654
        %v656 = vrot.slane %v614, %v655
        %v657 = vlaneseq
        %v658 = vshrl.u32 %v657, 7
        %v659 = vsub.s32 %v632, %v658
        %v660 = vrot.slane %v617, %v659
        %v661 = vlaneseq
        %v662 = vshrl.u32 %v661, 7
        %v663 = vsub.s32 %v632, %v662
        %v664 = vrot.slane %v620, %v663
        %vm665 = vcmask 1041409
        %v666 = vsel %vm665, %v640, %v636
        %vm667 = vcmask 1042434
        %v668 = vsel %vm667, %v644, %v666
        %vm669 = vcmask 1043459
        %v670 = vsel %vm669, %v648, %v668
        %vm671 = vcmask 1044484
        %v672 = vsel %vm671, %v652, %v670
        %vm673 = vcmask 1045509
        %v674 = vsel %vm673, %v656, %v672
        %vm675 = vcmask 1046534
        %v676 = vsel %vm675, %v660, %v674
        %vm677 = vcmask 1047559
        %v678 = vsel %vm677, %v664, %v676
        %v680 = vsel %vm622, %v678, -1e+30
        %vm681 = vcmask 64512
        %v682 = vsel %vm681, %v680, -inf
        %683 = vmax.xlane.f32.xlu0 %v682
        %v684 = vpop.xlane.xlu0 %683
        %v685 = vsub.f32 %v680, %v684
        %v686 = vmul.f32 %v685, 1.442695
        %v687 = vpow.pop %v686
        %v688 = vsel %vm622, %v687, 0.0
        %v689 = vsel %vm681, %v688, 0.0
        %690 = vadd.xlane.f32.xlu0 %v689
        %v691 = vpop.xlane.xlu0 %690
        %v692 = vmax.f32 %v691, 1e-20
        %v693 = vrcp.pop %v692
        %v694 = vmul.f32 %v688, %v693
        %v695 = vlaneseq
        %v696 = vshrl.u32 %v695, 7
        %v697 = vsub.s32 0, %v696
        %v698 = vrot.slane %v694, %v697
        %700 = vbcast.lane.b32.xlu0 %v698, 256
        %v701 = vpop.permute.xlu0 %700
        %v702 = vlaneseq
        %v703 = vshrl.u32 %v702, 7
        %v704 = vsub.s32 1, %v703
        %v705 = vrot.slane %v694, %v704
        %707 = vbcast.lane.b32.xlu0 %v705, 256
        %v708 = vpop.permute.xlu0 %707
        %v709 = vlaneseq
        %v710 = vshrl.u32 %v709, 7
        %v711 = vsub.s32 2, %v710
        %v712 = vrot.slane %v694, %v711
        %714 = vbcast.lane.b32.xlu0 %v712, 256
        %v715 = vpop.permute.xlu0 %714
        %v716 = vlaneseq
        %v717 = vshrl.u32 %v716, 7
        %v718 = vsub.s32 3, %v717
        %v719 = vrot.slane %v694, %v718
        %721 = vbcast.lane.b32.xlu0 %v719, 256
        %v722 = vpop.permute.xlu0 %721
        %v723 = vlaneseq
        %v724 = vshrl.u32 %v723, 7
        %v725 = vsub.s32 4, %v724
        %v726 = vrot.slane %v694, %v725
        %728 = vbcast.lane.b32.xlu0 %v726, 256
        %v729 = vpop.permute.xlu0 %728
        %v730 = vlaneseq
        %v731 = vshrl.u32 %v730, 7
        %v732 = vsub.s32 5, %v731
        %v733 = vrot.slane %v694, %v732
        %735 = vbcast.lane.b32.xlu0 %v733, 256
        %v736 = vpop.permute.xlu0 %735
        %v737 = vlaneseq
        %v738 = vshrl.u32 %v737, 7
        %v739 = vsub.s32 6, %v738
        %v740 = vrot.slane %v694, %v739
        %742 = vbcast.lane.b32.xlu0 %v740, 256
        %v743 = vpop.permute.xlu0 %742
        %v744 = vlaneseq
        %v745 = vshrl.u32 %v744, 7
        %v746 = vsub.s32 7, %v745
        %v747 = vrot.slane %v694, %v746
        %749 = vbcast.lane.b32.xlu0 %v747, 256
        %v750 = vpop.permute.xlu0 %749
        %v751 = vmul.f32 %v701, %v491
        %v752 = vmul.f32 %v708, %v492
        %v753 = vmul.f32 %v715, %v493
        %v754 = vmul.f32 %v722, %v494
        %v755 = vmul.f32 %v729, %v495
        %v756 = vmul.f32 %v736, %v496
        %v757 = vmul.f32 %v743, %v497
        %v758 = vmul.f32 %v750, %v498
        %v759 = vsel %vm376, %v751, 0.0
        %v760 = vrot.slane %v759, 4
        %v761 = vadd.f32 %v759, %v760
        %v762 = vrot.slane %v761, 2
        %v763 = vadd.f32 %v761, %v762
        %v764 = vrot.slane %v763, 1
        %v765 = vadd.f32 %v763, %v764
        %v766 = vsel %vm376, %v752, 0.0
        %v767 = vrot.slane %v766, 4
        %v768 = vadd.f32 %v766, %v767
        %v769 = vrot.slane %v768, 2
        %v770 = vadd.f32 %v768, %v769
        %v771 = vrot.slane %v770, 1
        %v772 = vadd.f32 %v770, %v771
        %v773 = vsel %vm376, %v753, 0.0
        %v774 = vrot.slane %v773, 4
        %v775 = vadd.f32 %v773, %v774
        %v776 = vrot.slane %v775, 2
        %v777 = vadd.f32 %v775, %v776
        %v778 = vrot.slane %v777, 1
        %v779 = vadd.f32 %v777, %v778
        %v780 = vsel %vm376, %v754, 0.0
        %v781 = vrot.slane %v780, 4
        %v782 = vadd.f32 %v780, %v781
        %v783 = vrot.slane %v782, 2
        %v784 = vadd.f32 %v782, %v783
        %v785 = vrot.slane %v784, 1
        %v786 = vadd.f32 %v784, %v785
        %v787 = vsel %vm376, %v755, 0.0
        %v788 = vrot.slane %v787, 4
        %v789 = vadd.f32 %v787, %v788
        %v790 = vrot.slane %v789, 2
        %v791 = vadd.f32 %v789, %v790
        %v792 = vrot.slane %v791, 1
        %v793 = vadd.f32 %v791, %v792
        %v794 = vsel %vm376, %v756, 0.0
        %v795 = vrot.slane %v794, 4
        %v796 = vadd.f32 %v794, %v795
        %v797 = vrot.slane %v796, 2
        %v798 = vadd.f32 %v796, %v797
        %v799 = vrot.slane %v798, 1
        %v800 = vadd.f32 %v798, %v799
        %v801 = vsel %vm376, %v757, 0.0
        %v802 = vrot.slane %v801, 4
        %v803 = vadd.f32 %v801, %v802
        %v804 = vrot.slane %v803, 2
        %v805 = vadd.f32 %v803, %v804
        %v806 = vrot.slane %v805, 1
        %v807 = vadd.f32 %v805, %v806
        %v808 = vsel %vm376, %v758, 0.0
        %v809 = vrot.slane %v808, 4
        %v810 = vadd.f32 %v808, %v809
        %v811 = vrot.slane %v810, 2
        %v812 = vadd.f32 %v810, %v811
        %v813 = vrot.slane %v812, 1
        %v814 = vadd.f32 %v812, %v813
        %p815 = scmp.eq.s32.totalorder %s26, 0
        // Predicated region
        $region49: #{tpu_custom_call.1} parent=43 // pred_check
          %p816 = pneg %p815
        $region50: #{tpu_custom_call.1} parent=43 // pred_check_branch
          %818 = sbr.rel (%p816) target = $region52
        $region51: #{tpu_custom_call.1} parent=43 // pred_region
          %819 = vst.msk [vmem:[#allocation5] sm:$0xff] %vm376, 0.0
        $region52: #{tpu_custom_call.1} parent=43 // pred_fallthru
          _
        %v820 = vld [vmem:[#allocation5] sm:$0xff]
        %v829 = vsel %vm665, %v772, %v765
        %v830 = vsel %vm667, %v779, %v829
        %v831 = vsel %vm669, %v786, %v830
        %v832 = vsel %vm671, %v793, %v831
        %v833 = vsel %vm673, %v800, %v832
        %v834 = vsel %vm675, %v807, %v833
        %v835 = vsel %vm677, %v814, %v834
        %v837 = vadd.f32 %v820, %v835
        %838 = vst.msk [vmem:[#allocation5] sm:$0xff] %vm376, %v837
        %p839 = scmp.eq.s32.totalorder %s26, 2
        // Predicated region
        $region53: #{tpu_custom_call.1} parent=43 // pred_check
          %p840 = pneg %p839
        $region54: #{tpu_custom_call.1} parent=43 // pred_check_branch
          %842 = sbr.rel (%p840) target = $region56
        $region55: #{tpu_custom_call.1} parent=43 // pred_region
          %v843 = vld [vmem:[#allocation5] sm:$0xff]
          %v844 = vmul.f32 %v843, 0.33333334
          %845 = vst.msk [vmem:[#allocation5] sm:$0xff] %vm376, %v844
        $region56: #{tpu_custom_call.1} parent=43 // pred_fallthru
          _
        // Predicated region
        $region57: #{tpu_custom_call.1} parent=43 // pred_check
          %p846 = pneg %p203
        $region58: #{tpu_custom_call.1} parent=43 // pred_check_branch
          %848 = sbr.rel (%p846) target = $region60
        $region59: #{tpu_custom_call.1} parent=43 // pred_region
          %s850 = ssub.s32 128, 128
          %851 = vsyncadd [#allocation4], %s850
          %s852 = smul.addr %s25, 128
          %s853 = scalar_lea.hbm %s6, %s852
          %s855 = sshll.u32 [#allocation5], 4
          %s856 = int_to_ptr.vmem [resolvable:$true] %s855
          %858 = dma.vmem_to_hbm [thread:$0]  %s856, 128, %s853, [#allocation4]
        $region60: #{tpu_custom_call.1} parent=43 // pred_fallthru
          _
        // Predicated region
        $region61: #{tpu_custom_call.1} parent=43 // pred_check
          %p859 = pneg %p203
        $region62: #{tpu_custom_call.1} parent=43 // pred_check_branch
          %861 = sbr.rel (%p859) target = $region64
        $region63: #{tpu_custom_call.1} parent=43 // pred_region
          %862 = dma.done [#allocation4], 128
        $region64: #{tpu_custom_call.1} parent=43 // pred_fallthru
          _
      $region44: #{tpu_custom_call.1} parent=5 // pred_fallthru
        _
      %p863 = scmp.le.s32.totalorder 2, %s16
      // Predicated region
      $region65: #{tpu_custom_call.1} parent=5 // pred_check
        %p864 = pneg %p863
      $region66: #{tpu_custom_call.1} parent=5 // pred_check_branch
        %866 = sbr.rel (%p864) target = $region68
      $region67: #{tpu_custom_call.1} parent=5 // pred_region
        %s867 = ssub.s32 %s16, 2
      $region68: #{tpu_custom_call.1} parent=5 // pred_fallthru
        _
    $region6: #{tpu_custom_call.1} parent=1 // loop_footer
      %s20 = sadd.s32 1, %s16
    $region7: #{tpu_custom_call.1} parent=1 // loop_footer_branch
      %15 = sbr.rel target = $region3
    $region8: #{tpu_custom_call.1} parent=1 // loop_exit
      _
    %868 = vsyncpa [#allocation3], 1
    %s869 = scalar_lea.sflag [#allocation3], 1
    %870 = vsyncpa %s869, 1
    %871 = vsyncpa [#allocation4], 1
    %s872 = scalar_lea.sflag [#allocation4], 1
    %873 = vsyncpa %s872, 1

</llo_original>
